<compile_context>
chip_gen: v7x
topology: tpu7x:2x2x1
jax: 0.10.0
libtpu: 0.0.40
codegen_flags: <defaults>
</compile_context>

<pallas_src>
import jax
import jax.numpy as jnp
from jax import lax
from jax.experimental import pallas as pl
from jax.experimental.pallas import tpu as pltpu


_DEFAULT_VMEM_BUDGET = 12 * 1024 * 1024   # bytes per (double-buffered) input block
_VMEM_LIMIT_BYTES = 48 * 1024 * 1024      # leaves headroom on every TPU generation


def _lm_criterion_kernel(inp_ref, tgt_ref, msk_ref, loss_ref, msum_ref):
    """Accumulate per-row masked-NLL sums and mask sums across the (L, V) grid axes."""
    l = pl.program_id(1)
    v = pl.program_id(2)

    @pl.when(jnp.logical_and(l == 0, v == 0))
    def _():
        loss_ref[...] = jnp.zeros_like(loss_ref)
        msum_ref[...] = jnp.zeros_like(msum_ref)

    x = inp_ref[...]                                   # (tn, tl, tv) native dtype
    tgt = tgt_ref[...][..., None]                      # (tn, tl, 1) int32
    msk = msk_ref[...].astype(jnp.float32)             # (tn, tl)

    tv = x.shape[2]
    # Global vocab ids covered by this V tile; both operands broadcast in the compare.
    vocab_ids = lax.broadcasted_iota(jnp.int32, (1, 1, tv), 2) + v * tv
    onehot = vocab_ids == tgt                          # (tn, tl, tv)
    # Exact in the native dtype: at most one nonzero term survives the reduce.
    # NOTE: out-of-range targets (e.g. padding ids) gather 0 - assumed masked.
    gathered = jnp.sum(jnp.where(onehot, x, jnp.zeros_like(x)), axis=2)   # (tn, tl)
    tok_loss = -gathered.astype(jnp.float32) * msk                        # (tn, tl) f32

    loss_ref[...] += jnp.sum(tok_loss, axis=1, keepdims=True)             # (tn, 1)

    @pl.when(v == 0)   # count each (n, l) position exactly once across V tiles
    def _():
        msum_ref[...] += jnp.sum(msk, axis=1, keepdims=True)              # (tn, 1)


def _pick_tiles(N, L, V, itemsize, budget_bytes):
    """Pick (tn, tl, tv): largest input block within `budget_bytes` (in BYTES, dtype
    aware), keeping every BlockSpec legal under the (8, 128) rule and preferring
    >= 2 grid steps along the parallel N axis (v7x megacore)."""
    # Vocab (lane) tile: multiple of 128 dividing V, else the full vocab.
    if V % 128 == 0:
        tv_cands = sorted({c for c in (V, 32768, 16384, 8192, 4096, 2048,
                                       1024, 512, 256, 128)
                           if c <= V and V % c == 0}, reverse=True)
    else:
        tv_cands = [V]
    # L tile: full L, or a multiple of 128 dividing L (keeps the 2-D target/mask
    # blocks lane-dense and legal).
    tl_cands = sorted({L} | {c for c in (2048, 1024, 512, 256, 128)
                             if c < L and L % c == 0}, reverse=True)
    # N tile: multiple of 8 dividing N, or full N.  Prefer >= 2 grid steps.
    tn_all = sorted({N} | {c for c in (512, 256, 128, 64, 32, 16, 8)
                           if c < N and N % c == 0}, reverse=True)
    tn_cands = [c for c in tn_all if N // c >= 2] or tn_all

    def fits(tn, tl, tv):
        return tn * tl * tv * itemsize <= budget_bytes

    for tv in tv_cands:
        for tl in tl_cands:
            for tn in tn_cands:
                if fits(tn, tl, tv):
                    return tn, tl, tv
    # Nothing fits the budget: fall back to the smallest expressible block.
    # TODO(synk): huge non-128-divisible vocabularies would need a DMA-gather path
    # (scalar-prefetched targets + narrow per-token copies) instead of streaming V.
    return tn_cands[-1], tl_cands[-1], tv_cands[-1]


def _lm_criterion_rowsums(inp, target, mask, *, vmem_budget_bytes=_DEFAULT_VMEM_BUDGET):
    """inp: [N, L, V], target: [N, L] int32, mask: [N, L] f32 ->
    (loss row-sums [N, 1] f32, mask row-sums [N, 1] f32)."""
    N, L, V = inp.shape
    tn, tl, tv = _pick_tiles(N, L, V, jnp.dtype(inp.dtype).itemsize, vmem_budget_bytes)

    grid = (N // tn, L // tl, V // tv)
    out_shape = (jax.ShapeDtypeStruct((N, 1), jnp.float32),
                 jax.ShapeDtypeStruct((N, 1), jnp.float32))

    return pl.pallas_call(
        _lm_criterion_kernel,
        out_shape=out_shape,
        grid=grid,
        in_specs=[
            pl.BlockSpec((tn, tl, tv), lambda n, l, v: (n, l, v)),   # log-probs
            pl.BlockSpec((tn, tl), lambda n, l, v: (n, l)),          # target (lane-dense)
            pl.BlockSpec((tn, tl), lambda n, l, v: (n, l)),          # mask   (lane-dense)
        ],
        out_specs=(
            pl.BlockSpec((tn, 1), lambda n, l, v: (n, 0)),
            pl.BlockSpec((tn, 1), lambda n, l, v: (n, 0)),
        ),
        compiler_params=pltpu.CompilerParams(
            dimension_semantics=("parallel", "arbitrary", "arbitrary"),
            vmem_limit_bytes=_VMEM_LIMIT_BYTES),
    )(inp, target, mask)


def language_model_criterion(inp, target, mask, reduction="mean",
                             *, vmem_budget_bytes=_DEFAULT_VMEM_BUDGET):
    """JAX/Pallas equivalent of LanguageModelCriterion.forward.

    Notes:
      * out-of-range targets (< 0 or >= V) gather 0; they are assumed to be masked,
        matching the usual usage of the torch module.
      * reduction='none' divides each row by its mask sum; an all-zero mask row
        yields inf/NaN, identical to a naive torch port.
    """
    if target.ndim == 3:
        target = target.reshape(-1, target.shape[2])
        mask = mask.reshape(-1, mask.shape[2])
    N, L = inp.shape[:2]
    target = target[:, :L].astype(jnp.int32)
    mask = mask[:, :L].astype(jnp.float32)

    loss_rows, mask_rows = _lm_criterion_rowsums(
        inp, target, mask, vmem_budget_bytes=vmem_budget_bytes)

    if reduction == "none":
        return loss_rows[:, 0] / mask_rows[:, 0]
    elif reduction == "mean":
        return jnp.sum(loss_rows) / jnp.sum(mask_rows)
    else:
        # TODO(synk): torch falls through and returns the unreduced [N, L] masked
        # NLL for other reduction strings; not exposed by this row-sum kernel.
        raise ValueError(f"unsupported reduction: {reduction!r}")


def language_model_criterion_reference(inp, target, mask, reduction="mean"):
    """Pure-JAX reference mirroring the PyTorch module."""
    if target.ndim == 3:
        target = target.reshape(-1, target.shape[2])
        mask = mask.reshape(-1, mask.shape[2])
    N, L = inp.shape[:2]
    target = target[:, :L].astype(jnp.int32)
    mask = mask[:, :L].astype(inp.dtype)
    gathered = jnp.take_along_axis(inp, target[..., None], axis=2)[..., 0]
    out = -gathered * mask
    if reduction == "none":
        return out.reshape(N, L).sum(1) / mask.reshape(N, L).sum(1)
    return jnp.sum(out) / jnp.sum(mask)


if __name__ == "__main__":
    key = jax.random.PRNGKey(0)

    def make_inputs(k, N, L_t, L, V):
        k_in, k_tgt, k_len = jax.random.split(k, 3)
        logits = jax.random.normal(k_in, (N, L, V), dtype=jnp.float32)
        log_probs = jax.nn.log_softmax(logits, axis=-1)
        target = jax.random.randint(k_tgt, (N, L_t), 0, V, dtype=jnp.int32)
        lengths = jax.random.randint(k_len, (N,), 1, L + 1)   # >= 1 valid token / row
        mask = (jnp.arange(L_t)[None, :] < lengths[:, None]).astype(jnp.float32)
        return log_probs, target, mask

    k1, k2 = jax.random.split(key)

    # Config 1: small shapes (single block along every axis).
    lp1, tgt1, msk1 = make_inputs(k1, N=8, L_t=20, L=16, V=512)
    out_mean = jax.block_until_ready(language_model_criterion(lp1, tgt1, msk1, "mean"))
    out_none = jax.block_until_ready(language_model_criterion(lp1, tgt1, msk1, "none"))
    ref_mean = language_model_criterion_reference(lp1, tgt1, msk1, "mean")
    ref_none = language_model_criterion_reference(lp1, tgt1, msk1, "none")
    assert out_mean.shape == (), out_mean.shape
    assert out_none.shape == (8,), out_none.shape
    assert jnp.allclose(out_mean, ref_mean, atol=1e-4, rtol=1e-4), "mean mismatch (cfg1)"
    assert jnp.allclose(out_none, ref_none, atol=1e-4, rtol=1e-4), "none mismatch (cfg1)"

    # Config 2: tiny VMEM budget to force multi-step grids along N, L AND V
    # (exercises the accumulator init/guard and the per-V-tile one-hot offset path).
    lp2, tgt2, msk2 = make_inputs(k2, N=16, L_t=260, L=256, V=1024)
    out2_mean = jax.block_until_ready(language_model_criterion(
        lp2, tgt2, msk2, "mean", vmem_budget_bytes=512 * 1024))
    out2_none = jax.block_until_ready(language_model_criterion(
        lp2, tgt2, msk2, "none", vmem_budget_bytes=512 * 1024))
    ref2_mean = language_model_criterion_reference(lp2, tgt2, msk2, "mean")
    ref2_none = language_model_criterion_reference(lp2, tgt2, msk2, "none")
    assert jnp.allclose(out2_mean, ref2_mean, atol=1e-4, rtol=1e-4), "mean mismatch (cfg2)"
    assert jnp.allclose(out2_none, ref2_none, atol=1e-4, rtol=1e-4), "none mismatch (cfg2)"

    print("KERNEL_OK")
</pallas_src>

<mosaic_0001>
module attributes {stable_mosaic.version = 11 : i64} {
  func.func @_lm_criterion_kernel(%arg0: i32, %arg1: i32, %arg2: i32, %arg3: memref<8x16x512xf32, #tpu.memory_space<vmem>>, %arg4: memref<8x16xi32, #tpu.memory_space<vmem>>, %arg5: memref<8x16xf32, #tpu.memory_space<vmem>>, %arg6: memref<8x1xf32, #tpu.memory_space<vmem>>, %arg7: memref<8x1xf32, #tpu.memory_space<vmem>>) attributes {dimension_semantics = [#tpu.dimension_semantics<parallel>, #tpu.dimension_semantics<arbitrary>, #tpu.dimension_semantics<arbitrary>], iteration_bounds = array<i64: 1, 1, 1>, scalar_prefetch = 0 : i64, scratch_operands = 0 : i64, tpu.core_type = #tpu.core_type<tc>, window_params = [{transform_indices = @transform_0, window_bounds = array<i64: 8, 16, 512>}, {transform_indices = @transform_1, window_bounds = array<i64: 8, 16>}, {transform_indices = @transform_2, window_bounds = array<i64: 8, 16>}, {transform_indices = @transform_3, window_bounds = array<i64: 8, 1>}, {transform_indices = @transform_4, window_bounds = array<i64: 8, 1>}]} {
    %c0_i32 = arith.constant 0 : i32
    %0 = arith.cmpi eq, %arg1, %c0_i32 : i32
    %c0_i32_0 = arith.constant 0 : i32
    %1 = arith.cmpi eq, %arg2, %c0_i32_0 : i32
    %2 = arith.andi %0, %1 : i1
    %3 = arith.extui %2 : i1 to i32
    %c0_i32_1 = arith.constant 0 : i32
    %4 = arith.cmpi ne, %3, %c0_i32_1 : i32
    scf.if %4 {
      %cst_17 = arith.constant 0.000000e+00 : f32
      %30 = vector.broadcast %cst_17 : f32 to vector<8x1xf32>
      %c0_18 = arith.constant 0 : index
      %c0_19 = arith.constant 0 : index
      %31 = vector.load %arg6[%c0_18, %c0_19] : memref<8x1xf32, #tpu.memory_space<vmem>>, vector<8x1xf32>
      tpu.vector_store %arg6[%c0_18, %c0_19], %30 {strides = array<i32>} : memref<8x1xf32, #tpu.memory_space<vmem>>, vector<8x1xf32>,
      %cst_20 = arith.constant 0.000000e+00 : f32
      %32 = vector.broadcast %cst_20 : f32 to vector<8x1xf32>
      %c0_21 = arith.constant 0 : index
      %c0_22 = arith.constant 0 : index
      %33 = vector.load %arg7[%c0_21, %c0_22] : memref<8x1xf32, #tpu.memory_space<vmem>>, vector<8x1xf32>
      tpu.vector_store %arg7[%c0_21, %c0_22], %32 {strides = array<i32>} : memref<8x1xf32, #tpu.memory_space<vmem>>, vector<8x1xf32>,
    } else {
    }
    %c0 = arith.constant 0 : index
    %c0_2 = arith.constant 0 : index
    %c0_3 = arith.constant 0 : index
    %5 = vector.load %arg3[%c0, %c0_2, %c0_3] : memref<8x16x512xf32, #tpu.memory_space<vmem>>, vector<8x16x512xf32>
    %c0_4 = arith.constant 0 : index
    %c0_5 = arith.constant 0 : index
    %6 = vector.load %arg4[%c0_4, %c0_5] : memref<8x16xi32, #tpu.memory_space<vmem>>, vector<8x16xi32>
    %7 = vector.shape_cast %6 : vector<8x16xi32> to vector<8x16x1xi32>
    %c0_6 = arith.constant 0 : index
    %c0_7 = arith.constant 0 : index
    %8 = vector.load %arg5[%c0_6, %c0_7] : memref<8x16xf32, #tpu.memory_space<vmem>>, vector<8x16xf32>
    %9 = tpu.iota {dimensions = array<i32: 2>} : vector<1x1x512xi32>
    %c512_i32 = arith.constant 512 : i32
    %10 = arith.muli %arg2, %c512_i32 : i32
    %11 = vector.broadcast %10 : i32 to vector<1x1x512xi32>
    %12 = arith.addi %9, %11 : vector<1x1x512xi32>
    %13 = vector.broadcast %12 : vector<1x1x512xi32> to vector<8x16x512xi32>
    %14 = vector.broadcast %7 : vector<8x16x1xi32> to vector<8x16x512xi32>
    %15 = arith.cmpi eq, %13, %14 : vector<8x16x512xi32>
    %cst = arith.constant 0.000000e+00 : f32
    %16 = vector.broadcast %cst : f32 to vector<8x16x512xf32>
    %17 = arith.select %15, %5, %16 : vector<8x16x512xi1>, vector<8x16x512xf32>
    %cst_8 = arith.constant dense<0.000000e+00> : vector<8x16xf32>
    %18 = vector.multi_reduction <add>, %17, %cst_8 [2] : vector<8x16x512xf32> to vector<8x16xf32>
    %cst_9 = arith.constant 0.000000e+00 : f32
    %19 = vector.broadcast %cst_9 : f32 to vector<8x16xf32>
    %20 = arith.subf %19, %18 : vector<8x16xf32>
    %21 = arith.mulf %20, %8 : vector<8x16xf32>
    %c0_10 = arith.constant 0 : index
    %c0_11 = arith.constant 0 : index
    %22 = vector.load %arg6[%c0_10, %c0_11] : memref<8x1xf32, #tpu.memory_space<vmem>>, vector<8x1xf32>
    %cst_12 = arith.constant dense<0.000000e+00> : vector<8xf32>
    %23 = vector.multi_reduction <add>, %21, %cst_12 [1] : vector<8x16xf32> to vector<8xf32>
    %24 = vector.shape_cast %23 : vector<8xf32> to vector<8x1xf32>
    %25 = arith.addf %22, %24 : vector<8x1xf32>
    %c0_13 = arith.constant 0 : index
    %c0_14 = arith.constant 0 : index
    %26 = vector.load %arg6[%c0_13, %c0_14] : memref<8x1xf32, #tpu.memory_space<vmem>>, vector<8x1xf32>
    tpu.vector_store %arg6[%c0_13, %c0_14], %25 {strides = array<i32>} : memref<8x1xf32, #tpu.memory_space<vmem>>, vector<8x1xf32>,
    %c0_i32_15 = arith.constant 0 : i32
    %27 = arith.cmpi eq, %arg2, %c0_i32_15 : i32
    %28 = arith.extui %27 : i1 to i32
    %c0_i32_16 = arith.constant 0 : i32
    %29 = arith.cmpi ne, %28, %c0_i32_16 : i32
    scf.if %29 {
      %c0_17 = arith.constant 0 : index
      %c0_18 = arith.constant 0 : index
      %30 = vector.load %arg7[%c0_17, %c0_18] : memref<8x1xf32, #tpu.memory_space<vmem>>, vector<8x1xf32>
      %cst_19 = arith.constant dense<0.000000e+00> : vector<8xf32>
      %31 = vector.multi_reduction <add>, %8, %cst_19 [1] : vector<8x16xf32> to vector<8xf32>
      %32 = vector.shape_cast %31 : vector<8xf32> to vector<8x1xf32>
      %33 = arith.addf %30, %32 : vector<8x1xf32>
      %c0_20 = arith.constant 0 : index
      %c0_21 = arith.constant 0 : index
      %34 = vector.load %arg7[%c0_20, %c0_21] : memref<8x1xf32, #tpu.memory_space<vmem>>, vector<8x1xf32>
      tpu.vector_store %arg7[%c0_20, %c0_21], %33 {strides = array<i32>} : memref<8x1xf32, #tpu.memory_space<vmem>>, vector<8x1xf32>,
    } else {
    }
    return
  }
  func.func @transform_0(%arg0: i32, %arg1: i32, %arg2: i32) -> (i32, i32, i32) {
    %c0_i32 = arith.constant 0 : i32
    return %arg0, %arg1, %arg2 : i32, i32, i32
  }
  func.func @transform_1(%arg0: i32, %arg1: i32, %arg2: i32) -> (i32, i32) {
    %c0_i32 = arith.constant 0 : i32
    return %arg0, %arg1 : i32, i32
  }
  func.func @transform_2(%arg0: i32, %arg1: i32, %arg2: i32) -> (i32, i32) {
    %c0_i32 = arith.constant 0 : i32
    return %arg0, %arg1 : i32, i32
  }
  func.func @transform_3(%arg0: i32, %arg1: i32, %arg2: i32) -> (i32, i32) {
    %c0_i32 = arith.constant 0 : i32
    %c0_i32_0 = arith.constant 0 : i32
    return %arg0, %c0_i32 : i32, i32
  }
  func.func @transform_4(%arg0: i32, %arg1: i32, %arg2: i32) -> (i32, i32) {
    %c0_i32 = arith.constant 0 : i32
    %c0_i32_0 = arith.constant 0 : i32
    return %arg0, %c0_i32 : i32, i32
  }
}

</mosaic_0001>

<llo_original>
// kernel: tpu_custom_call.1
$region0: #{tpu_custom_call.1}
  #allocation0 [shape = 'u32[]', space=smem, size = 0x4, offset = 0x4, fixed_abs, tag = 'smem constant byte address 0x4 - core index']
  #allocation1 [shape = 'u32[144,128]{1,0:T(1,128)}', space=vmem, size = 0x12000, scoped, tag = 'internal scratch']
  %s0 = inlined_call_operand.hbm [shape: f32[8,16,512], index: 0, kind: input, shape index: {}]
  %s1 = inlined_call_operand.hbm [shape: s32[8,16], index: 1, kind: input, shape index: {}]
  %s2 = inlined_call_operand.hbm [shape: f32[8,16], index: 2, kind: input, shape index: {}]
  %s3 = inlined_call_operand.vmem [shape: f32[8,1], index: 3, kind: output, shape index: {0}]
  %s4 = inlined_call_operand.vmem [shape: f32[8,1], index: 4, kind: output, shape index: {1}]
  %5 = xla_tuple %s3, %s4
  %s6 = sld [smem:[#allocation0]]
  $region50: #{tpu_custom_call.1} parent=0
    _
  %s8 = ssub.s32 1, %s6
  %s9 = scalar_select 0, %s8, %s6
  $region1: #{tpu_custom_call.1} parent=0
    #allocation2 [shape = 'u8[262144]{0}', space=vmem, size = 0x40000, scoped, tag = 'input window, operand 0, single buffered']
    #allocation3 [shape = 's32[1]{0}', space=sflag, size = 0x4, scoped, tag = 'scoped memory for tpu_custom_call.1']
    #allocation4 [shape = 'u8[4096]{0}', space=vmem, size = 0x1000, scoped, tag = 'input window, operand 1, single buffered']
    #allocation5 [shape = 's32[1]{0}', space=sflag, size = 0x4, scoped, tag = 'scoped memory for tpu_custom_call.1']
    #allocation6 [shape = 'u8[4096]{0}', space=vmem, size = 0x1000, scoped, tag = 'input window, operand 2, single buffered']
    %10 = vsyncpa [#allocation3], 0
    %11 = vsyncpa [#allocation5], 0
    // Predicated region
    $region2: #{tpu_custom_call.1} parent=1 // pred_check
      _
    $region3: #{tpu_custom_call.1} parent=1 // pred_check_branch
      %13 = sbr.rel (0) target = $region5
    $region4: #{tpu_custom_call.1} parent=1 // pred_region
      %s15 = ssub.s32 8192, 8192
      %16 = vsyncadd [#allocation3], %s15
      %s17 = sshll.u32 [#allocation2], 4
      %s18 = int_to_ptr.vmem [resolvable:$true] %s17
      %23 = dma.hbm_to_vmem [thread:$0]  %s0, 8192, %s18, [#allocation3], 512, 512, 32
    $region5: #{tpu_custom_call.1} parent=1 // pred_fallthru
      _
    // Predicated region
    $region6: #{tpu_custom_call.1} parent=1 // pred_check
      _
    $region7: #{tpu_custom_call.1} parent=1 // pred_check_branch
      %25 = sbr.rel (0) target = $region9
    $region8: #{tpu_custom_call.1} parent=1 // pred_region
      %s27 = ssub.s32 128, 128
      %28 = vsyncadd [#allocation5], %s27
      %s30 = sshll.u32 [#allocation4], 4
      %s31 = int_to_ptr.vmem [resolvable:$true] %s30
      %33 = dma.hbm_to_vmem [thread:$0]  %s1, 128, %s31, [#allocation5]
    $region9: #{tpu_custom_call.1} parent=1 // pred_fallthru
      _
    // Predicated region
    $region10: #{tpu_custom_call.1} parent=1 // pred_check
      _
    $region11: #{tpu_custom_call.1} parent=1 // pred_check_branch
      %35 = sbr.rel (0) target = $region13
    $region12: #{tpu_custom_call.1} parent=1 // pred_region
      %s37 = ssub.s32 128, 128
      %38 = vsyncadd [#allocation5], %s37
      %s40 = sshll.u32 [#allocation6], 4
      %s41 = int_to_ptr.vmem [resolvable:$true] %s40
      %43 = dma.hbm_to_vmem [thread:$0]  %s2, 128, %s41, [#allocation5]
    $region13: #{tpu_custom_call.1} parent=1 // pred_fallthru
      _
    // Predicated region
    $region14: #{tpu_custom_call.1} parent=1 // pred_check
      _
    $region15: #{tpu_custom_call.1} parent=1 // pred_check_branch
      %45 = sbr.rel (0) target = $region17
    $region16: #{tpu_custom_call.1} parent=1 // pred_region
      %46 = dma.done [#allocation3], 8192
    $region17: #{tpu_custom_call.1} parent=1 // pred_fallthru
      _
    // Predicated region
    $region18: #{tpu_custom_call.1} parent=1 // pred_check
      _
    $region19: #{tpu_custom_call.1} parent=1 // pred_check_branch
      %48 = sbr.rel (0) target = $region21
    $region20: #{tpu_custom_call.1} parent=1 // pred_region
      %49 = dma.done [#allocation5], 128
    $region21: #{tpu_custom_call.1} parent=1 // pred_fallthru
      _
    // Predicated region
    $region22: #{tpu_custom_call.1} parent=1 // pred_check
      _
    $region23: #{tpu_custom_call.1} parent=1 // pred_check_branch
      %51 = sbr.rel (0) target = $region25
    $region24: #{tpu_custom_call.1} parent=1 // pred_region
      %52 = dma.done [#allocation5], 128
    $region25: #{tpu_custom_call.1} parent=1 // pred_fallthru
      _
    %p53 = scmp.eq.s32.totalorder 0, 0
    %p54 = scmp.eq.s32.totalorder 0, 0
    %p55 = pnand %p53, %p54
    %p56 = pneg %p55
    // Predicated region
    $region26: #{tpu_custom_call.1} parent=1 // pred_check
      _
    $region27: #{tpu_custom_call.1} parent=1 // pred_check_branch
      %58 = sbr.rel (%p55) target = $region29
    $region28: #{tpu_custom_call.1} parent=1 // pred_region
      %vm59 = vcmask 7168
      %60 = vst.msk [vmem:[%s3] sm:$0xff] %vm59, 0.0
      %61 = vst.msk [vmem:[%s4] sm:$0xff] %vm59, 0.0
    $region29: #{tpu_custom_call.1} parent=1 // pred_fallthru
      _
    %v62 = vld [vmem:[#allocation2] sm:$0xff]
    %v63 = vld [vmem:[#allocation2 + $0x8] sm:$0xff]
    %v64 = vld [vmem:[#allocation2 + $0x10] sm:$0xff]
    %v65 = vld [vmem:[#allocation2 + $0x18] sm:$0xff]
    %v66 = vld [vmem:[#allocation2 + $0x20] sm:$0xff]
    %v67 = vld [vmem:[#allocation2 + $0x28] sm:$0xff]
    %v68 = vld [vmem:[#allocation2 + $0x30] sm:$0xff]
    %v69 = vld [vmem:[#allocation2 + $0x38] sm:$0xff]
    %v70 = vld [vmem:[#allocation2 + $0x40] sm:$0xff]
    %v71 = vld [vmem:[#allocation2 + $0x48] sm:$0xff]
    %v72 = vld [vmem:[#allocation2 + $0x50] sm:$0xff]
    %v73 = vld [vmem:[#allocation2 + $0x58] sm:$0xff]
    %v74 = vld [vmem:[#allocation2 + $0x60] sm:$0xff]
    %v75 = vld [vmem:[#allocation2 + $0x68] sm:$0xff]
    %v76 = vld [vmem:[#allocation2 + $0x70] sm:$0xff]
    %v77 = vld [vmem:[#allocation2 + $0x78] sm:$0xff]
    %v78 = vld [vmem:[#allocation2 + $0x80] sm:$0xff]
    %v79 = vld [vmem:[#allocation2 + $0x88] sm:$0xff]
    %v80 = vld [vmem:[#allocation2 + $0x90] sm:$0xff]
    %v81 = vld [vmem:[#allocation2 + $0x98] sm:$0xff]
    %v82 = vld [vmem:[#allocation2 + $0xa0] sm:$0xff]
    %v83 = vld [vmem:[#allocation2 + $0xa8] sm:$0xff]
    %v84 = vld [vmem:[#allocation2 + $0xb0] sm:$0xff]
    %v85 = vld [vmem:[#allocation2 + $0xb8] sm:$0xff]
    %v86 = vld [vmem:[#allocation2 + $0xc0] sm:$0xff]
    %v87 = vld [vmem:[#allocation2 + $0xc8] sm:$0xff]
    %v88 = vld [vmem:[#allocation2 + $0xd0] sm:$0xff]
    %v89 = vld [vmem:[#allocation2 + $0xd8] sm:$0xff]
    %v90 = vld [vmem:[#allocation2 + $0xe0] sm:$0xff]
    %v91 = vld [vmem:[#allocation2 + $0xe8] sm:$0xff]
    %v92 = vld [vmem:[#allocation2 + $0xf0] sm:$0xff]
    %v93 = vld [vmem:[#allocation2 + $0xf8] sm:$0xff]
    %v94 = vld [vmem:[#allocation2 + $0x100] sm:$0xff]
    %v95 = vld [vmem:[#allocation2 + $0x108] sm:$0xff]
    %v96 = vld [vmem:[#allocation2 + $0x110] sm:$0xff]
    %v97 = vld [vmem:[#allocation2 + $0x118] sm:$0xff]
    %v98 = vld [vmem:[#allocation2 + $0x120] sm:$0xff]
    %v99 = vld [vmem:[#allocation2 + $0x128] sm:$0xff]
    %v100 = vld [vmem:[#allocation2 + $0x130] sm:$0xff]
    %v101 = vld [vmem:[#allocation2 + $0x138] sm:$0xff]
    %v102 = vld [vmem:[#allocation2 + $0x140] sm:$0xff]
    %v103 = vld [vmem:[#allocation2 + $0x148] sm:$0xff]
    %v104 = vld [vmem:[#allocation2 + $0x150] sm:$0xff]
    %v105 = vld [vmem:[#allocation2 + $0x158] sm:$0xff]
    %v106 = vld [vmem:[#allocation2 + $0x160] sm:$0xff]
    %v107 = vld [vmem:[#allocation2 + $0x168] sm:$0xff]
    %v108 = vld [vmem:[#allocation2 + $0x170] sm:$0xff]
    %v109 = vld [vmem:[#allocation2 + $0x178] sm:$0xff]
    %v110 = vld [vmem:[#allocation2 + $0x180] sm:$0xff]
    %v111 = vld [vmem:[#allocation2 + $0x188] sm:$0xff]
    %v112 = vld [vmem:[#allocation2 + $0x190] sm:$0xff]
    %v113 = vld [vmem:[#allocation2 + $0x198] sm:$0xff]
    %v114 = vld [vmem:[#allocation2 + $0x1a0] sm:$0xff]
    %v115 = vld [vmem:[#allocation2 + $0x1a8] sm:$0xff]
    %v116 = vld [vmem:[#allocation2 + $0x1b0] sm:$0xff]
    %v117 = vld [vmem:[#allocation2 + $0x1b8] sm:$0xff]
    %v118 = vld [vmem:[#allocation2 + $0x1c0] sm:$0xff]
    %v119 = vld [vmem:[#allocation2 + $0x1c8] sm:$0xff]
    %v120 = vld [vmem:[#allocation2 + $0x1d0] sm:$0xff]
    %v121 = vld [vmem:[#allocation2 + $0x1d8] sm:$0xff]
    %v122 = vld [vmem:[#allocation2 + $0x1e0] sm:$0xff]
    %v123 = vld [vmem:[#allocation2 + $0x1e8] sm:$0xff]
    %v124 = vld [vmem:[#allocation2 + $0x1f0] sm:$0xff]
    %v125 = vld [vmem:[#allocation2 + $0x1f8] sm:$0xff]
    %v126 = vld [vmem:[#allocation4] sm:$0xff]
    %v127 = vlaneseq
    %v128 = vshrl.u32 %v127, 7
    %v129 = vsub.s32 0, %v128
    %v130 = vrot.slane %v126, %v129
    %132 = vbcast.lane.b32.xlu0 %v130, 256
    %v133 = vpop.permute.xlu0 %132
    %s135 = sor.u32 256, 8
    %136 = vbcast.lane.b32.xlu0 %v130, %s135
    %v137 = vpop.permute.xlu0 %136
    %v138 = vlaneseq
    %v139 = vshrl.u32 %v138, 7
    %v140 = vsub.s32 1, %v139
    %v141 = vrot.slane %v126, %v140
    %143 = vbcast.lane.b32.xlu0 %v141, 256
    %v144 = vpop.permute.xlu0 %143
    %s146 = sor.u32 256, 8
    %147 = vbcast.lane.b32.xlu0 %v141, %s146
    %v148 = vpop.permute.xlu0 %147
    %v149 = vlaneseq
    %v150 = vshrl.u32 %v149, 7
    %v151 = vsub.s32 2, %v150
    %v152 = vrot.slane %v126, %v151
    %154 = vbcast.lane.b32.xlu0 %v152, 256
    %v155 = vpop.permute.xlu0 %154
    %s157 = sor.u32 256, 8
    %158 = vbcast.lane.b32.xlu0 %v152, %s157
    %v159 = vpop.permute.xlu0 %158
    %v160 = vlaneseq
    %v161 = vshrl.u32 %v160, 7
    %v162 = vsub.s32 3, %v161
    %v163 = vrot.slane %v126, %v162
    %165 = vbcast.lane.b32.xlu0 %v163, 256
    %v166 = vpop.permute.xlu0 %165
    %s168 = sor.u32 256, 8
    %169 = vbcast.lane.b32.xlu0 %v163, %s168
    %v170 = vpop.permute.xlu0 %169
    %v171 = vlaneseq
    %v172 = vshrl.u32 %v171, 7
    %v173 = vsub.s32 4, %v172
    %v174 = vrot.slane %v126, %v173
    %176 = vbcast.lane.b32.xlu0 %v174, 256
    %v177 = vpop.permute.xlu0 %176
    %s179 = sor.u32 256, 8
    %180 = vbcast.lane.b32.xlu0 %v174, %s179
    %v181 = vpop.permute.xlu0 %180
    %v182 = vlaneseq
    %v183 = vshrl.u32 %v182, 7
    %v184 = vsub.s32 5, %v183
    %v185 = vrot.slane %v126, %v184
    %187 = vbcast.lane.b32.xlu0 %v185, 256
    %v188 = vpop.permute.xlu0 %187
    %s190 = sor.u32 256, 8
    %191 = vbcast.lane.b32.xlu0 %v185, %s190
    %v192 = vpop.permute.xlu0 %191
    %v193 = vlaneseq
    %v194 = vshrl.u32 %v193, 7
    %v195 = vsub.s32 6, %v194
    %v196 = vrot.slane %v126, %v195
    %198 = vbcast.lane.b32.xlu0 %v196, 256
    %v199 = vpop.permute.xlu0 %198
    %s201 = sor.u32 256, 8
    %202 = vbcast.lane.b32.xlu0 %v196, %s201
    %v203 = vpop.permute.xlu0 %202
    %v204 = vlaneseq
    %v205 = vshrl.u32 %v204, 7
    %v206 = vsub.s32 7, %v205
    %v207 = vrot.slane %v126, %v206
    %209 = vbcast.lane.b32.xlu0 %v207, 256
    %v210 = vpop.permute.xlu0 %209
    %s212 = sor.u32 256, 8
    %213 = vbcast.lane.b32.xlu0 %v207, %s212
    %v214 = vpop.permute.xlu0 %213
    %v215 = vld [vmem:[#allocation6] sm:$0xff]
    %v216 = vlaneseq
    %v217 = vand.u32 %v216, 127
    %v218 = vadd.s32 %v217, 128
    %v219 = vadd.s32 %v217, 256
    %v220 = vadd.s32 %v217, 384
    %s221 = smul.u32 0, 512
    %v222 = vstv %s221
    %v223 = vadd.s32 %v217, %v222
    %v224 = vadd.s32 %v218, %v222
    %v225 = vadd.s32 %v219, %v222
    %v226 = vadd.s32 %v220, %v222
    %vm227 = vcmp.eq.s32.totalorder %v223, %v133
    %vm228 = vcmp.eq.s32.totalorder %v224, %v133
    %vm229 = vcmp.eq.s32.totalorder %v225, %v133
    %vm230 = vcmp.eq.s32.totalorder %v226, %v133
    %vm231 = vcmp.eq.s32.totalorder %v223, %v137
    %vm232 = vcmp.eq.s32.totalorder %v224, %v137
    %vm233 = vcmp.eq.s32.totalorder %v225, %v137
    %vm234 = vcmp.eq.s32.totalorder %v226, %v137
    %vm235 = vcmp.eq.s32.totalorder %v223, %v144
    %vm236 = vcmp.eq.s32.totalorder %v224, %v144
    %vm237 = vcmp.eq.s32.totalorder %v225, %v144
    %vm238 = vcmp.eq.s32.totalorder %v226, %v144
    %vm239 = vcmp.eq.s32.totalorder %v223, %v148
    %vm240 = vcmp.eq.s32.totalorder %v224, %v148
    %vm241 = vcmp.eq.s32.totalorder %v225, %v148
    %vm242 = vcmp.eq.s32.totalorder %v226, %v148
    %vm243 = vcmp.eq.s32.totalorder %v223, %v155
    %vm244 = vcmp.eq.s32.totalorder %v224, %v155
    %vm245 = vcmp.eq.s32.totalorder %v225, %v155
    %vm246 = vcmp.eq.s32.totalorder %v226, %v155
    %vm247 = vcmp.eq.s32.totalorder %v223, %v159
    %vm248 = vcmp.eq.s32.totalorder %v224, %v159
    %vm249 = vcmp.eq.s32.totalorder %v225, %v159
    %vm250 = vcmp.eq.s32.totalorder %v226, %v159
    %vm251 = vcmp.eq.s32.totalorder %v223, %v166
    %vm252 = vcmp.eq.s32.totalorder %v224, %v166
    %vm253 = vcmp.eq.s32.totalorder %v225, %v166
    %vm254 = vcmp.eq.s32.totalorder %v226, %v166
    %vm255 = vcmp.eq.s32.totalorder %v223, %v170
    %vm256 = vcmp.eq.s32.totalorder %v224, %v170
    %vm257 = vcmp.eq.s32.totalorder %v225, %v170
    %vm258 = vcmp.eq.s32.totalorder %v226, %v170
    %vm259 = vcmp.eq.s32.totalorder %v223, %v177
    %vm260 = vcmp.eq.s32.totalorder %v224, %v177
    %vm261 = vcmp.eq.s32.totalorder %v225, %v177
    %vm262 = vcmp.eq.s32.totalorder %v226, %v177
    %vm263 = vcmp.eq.s32.totalorder %v223, %v181
    %vm264 = vcmp.eq.s32.totalorder %v224, %v181
    %vm265 = vcmp.eq.s32.totalorder %v225, %v181
    %vm266 = vcmp.eq.s32.totalorder %v226, %v181
    %vm267 = vcmp.eq.s32.totalorder %v223, %v188
    %vm268 = vcmp.eq.s32.totalorder %v224, %v188
    %vm269 = vcmp.eq.s32.totalorder %v225, %v188
    %vm270 = vcmp.eq.s32.totalorder %v226, %v188
    %vm271 = vcmp.eq.s32.totalorder %v223, %v192
    %vm272 = vcmp.eq.s32.totalorder %v224, %v192
    %vm273 = vcmp.eq.s32.totalorder %v225, %v192
    %vm274 = vcmp.eq.s32.totalorder %v226, %v192
    %vm275 = vcmp.eq.s32.totalorder %v223, %v199
    %vm276 = vcmp.eq.s32.totalorder %v224, %v199
    %vm277 = vcmp.eq.s32.totalorder %v225, %v199
    %vm278 = vcmp.eq.s32.totalorder %v226, %v199
    %vm279 = vcmp.eq.s32.totalorder %v223, %v203
    %vm280 = vcmp.eq.s32.totalorder %v224, %v203
    %vm281 = vcmp.eq.s32.totalorder %v225, %v203
    %vm282 = vcmp.eq.s32.totalorder %v226, %v203
    %vm283 = vcmp.eq.s32.totalorder %v223, %v210
    %vm284 = vcmp.eq.s32.totalorder %v224, %v210
    %vm285 = vcmp.eq.s32.totalorder %v225, %v210
    %vm286 = vcmp.eq.s32.totalorder %v226, %v210
    %vm287 = vcmp.eq.s32.totalorder %v223, %v214
    %vm288 = vcmp.eq.s32.totalorder %v224, %v214
    %vm289 = vcmp.eq.s32.totalorder %v225, %v214
    %vm290 = vcmp.eq.s32.totalorder %v226, %v214
    %v291 = vsel %vm227, %v62, 0.0
    %v292 = vsel %vm228, %v63, 0.0
    %v293 = vsel %vm229, %v64, 0.0
    %v294 = vsel %vm230, %v65, 0.0
    %v295 = vsel %vm231, %v66, 0.0
    %v296 = vsel %vm232, %v67, 0.0
    %v297 = vsel %vm233, %v68, 0.0
    %v298 = vsel %vm234, %v69, 0.0
    %v299 = vsel %vm235, %v70, 0.0
    %v300 = vsel %vm236, %v71, 0.0
    %v301 = vsel %vm237, %v72, 0.0
    %v302 = vsel %vm238, %v73, 0.0
    %v303 = vsel %vm239, %v74, 0.0
    %v304 = vsel %vm240, %v75, 0.0
    %v305 = vsel %vm241, %v76, 0.0
    %v306 = vsel %vm242, %v77, 0.0
    %v307 = vsel %vm243, %v78, 0.0
    %v308 = vsel %vm244, %v79, 0.0
    %v309 = vsel %vm245, %v80, 0.0
    %v310 = vsel %vm246, %v81, 0.0
    %v311 = vsel %vm247, %v82, 0.0
    %v312 = vsel %vm248, %v83, 0.0
    %v313 = vsel %vm249, %v84, 0.0
    %v314 = vsel %vm250, %v85, 0.0
    %v315 = vsel %vm251, %v86, 0.0
    %v316 = vsel %vm252, %v87, 0.0
    %v317 = vsel %vm253, %v88, 0.0
    %v318 = vsel %vm254, %v89, 0.0
    %v319 = vsel %vm255, %v90, 0.0
    %v320 = vsel %vm256, %v91, 0.0
    %v321 = vsel %vm257, %v92, 0.0
    %v322 = vsel %vm258, %v93, 0.0
    %v323 = vsel %vm259, %v94, 0.0
    %v324 = vsel %vm260, %v95, 0.0
    %v325 = vsel %vm261, %v96, 0.0
    %v326 = vsel %vm262, %v97, 0.0
    %v327 = vsel %vm263, %v98, 0.0
    %v328 = vsel %vm264, %v99, 0.0
    %v329 = vsel %vm265, %v100, 0.0
    %v330 = vsel %vm266, %v101, 0.0
    %v331 = vsel %vm267, %v102, 0.0
    %v332 = vsel %vm268, %v103, 0.0
    %v333 = vsel %vm269, %v104, 0.0
    %v334 = vsel %vm270, %v105, 0.0
    %v335 = vsel %vm271, %v106, 0.0
    %v336 = vsel %vm272, %v107, 0.0
    %v337 = vsel %vm273, %v108, 0.0
    %v338 = vsel %vm274, %v109, 0.0
    %v339 = vsel %vm275, %v110, 0.0
    %v340 = vsel %vm276, %v111, 0.0
    %v341 = vsel %vm277, %v112, 0.0
    %v342 = vsel %vm278, %v113, 0.0
    %v343 = vsel %vm279, %v114, 0.0
    %v344 = vsel %vm280, %v115, 0.0
    %v345 = vsel %vm281, %v116, 0.0
    %v346 = vsel %vm282, %v117, 0.0
    %v347 = vsel %vm283, %v118, 0.0
    %v348 = vsel %vm284, %v119, 0.0
    %v349 = vsel %vm285, %v120, 0.0
    %v350 = vsel %vm286, %v121, 0.0
    %v351 = vsel %vm287, %v122, 0.0
    %v352 = vsel %vm288, %v123, 0.0
    %v353 = vsel %vm289, %v124, 0.0
    %v354 = vsel %vm290, %v125, 0.0
    %v355 = vadd.f32 %v291, %v292
    %v356 = vadd.f32 %v355, %v293
    %v357 = vadd.f32 %v356, %v294
    %358 = vadd.xlane.f32.xlu0 %v357
    %v359 = vpop.xlane.xlu0 %358
    %v360 = vadd.f32 %v295, %v296
    %v361 = vadd.f32 %v360, %v297
    %v362 = vadd.f32 %v361, %v298
    %363 = vadd.xlane.f32.xlu0 %v362
    %v364 = vpop.xlane.xlu0 %363
    %v365 = vadd.f32 %v299, %v300
    %v366 = vadd.f32 %v365, %v301
    %v367 = vadd.f32 %v366, %v302
    %368 = vadd.xlane.f32.xlu0 %v367
    %v369 = vpop.xlane.xlu0 %368
    %v370 = vadd.f32 %v303, %v304
    %v371 = vadd.f32 %v370, %v305
    %v372 = vadd.f32 %v371, %v306
    %373 = vadd.xlane.f32.xlu0 %v372
    %v374 = vpop.xlane.xlu0 %373
    %v375 = vadd.f32 %v307, %v308
    %v376 = vadd.f32 %v375, %v309
    %v377 = vadd.f32 %v376, %v310
    %378 = vadd.xlane.f32.xlu0 %v377
    %v379 = vpop.xlane.xlu0 %378
    %v380 = vadd.f32 %v311, %v312
    %v381 = vadd.f32 %v380, %v313
    %v382 = vadd.f32 %v381, %v314
    %383 = vadd.xlane.f32.xlu0 %v382
    %v384 = vpop.xlane.xlu0 %383
    %v385 = vadd.f32 %v315, %v316
    %v386 = vadd.f32 %v385, %v317
    %v387 = vadd.f32 %v386, %v318
    %388 = vadd.xlane.f32.xlu0 %v387
    %v389 = vpop.xlane.xlu0 %388
    %v390 = vadd.f32 %v319, %v320
    %v391 = vadd.f32 %v390, %v321
    %v392 = vadd.f32 %v391, %v322
    %393 = vadd.xlane.f32.xlu0 %v392
    %v394 = vpop.xlane.xlu0 %393
    %v395 = vadd.f32 %v323, %v324
    %v396 = vadd.f32 %v395, %v325
    %v397 = vadd.f32 %v396, %v326
    %398 = vadd.xlane.f32.xlu0 %v397
    %v399 = vpop.xlane.xlu0 %398
    %v400 = vadd.f32 %v327, %v328
    %v401 = vadd.f32 %v400, %v329
    %v402 = vadd.f32 %v401, %v330
    %403 = vadd.xlane.f32.xlu0 %v402
    %v404 = vpop.xlane.xlu0 %403
    %v405 = vadd.f32 %v331, %v332
    %v406 = vadd.f32 %v405, %v333
    %v407 = vadd.f32 %v406, %v334
    %408 = vadd.xlane.f32.xlu0 %v407
    %v409 = vpop.xlane.xlu0 %408
    %v410 = vadd.f32 %v335, %v336
    %v411 = vadd.f32 %v410, %v337
    %v412 = vadd.f32 %v411, %v338
    %413 = vadd.xlane.f32.xlu0 %v412
    %v414 = vpop.xlane.xlu0 %413
    %v415 = vadd.f32 %v339, %v340
    %v416 = vadd.f32 %v415, %v341
    %v417 = vadd.f32 %v416, %v342
    %418 = vadd.xlane.f32.xlu0 %v417
    %v419 = vpop.xlane.xlu0 %418
    %v420 = vadd.f32 %v343, %v344
    %v421 = vadd.f32 %v420, %v345
    %v422 = vadd.f32 %v421, %v346
    %423 = vadd.xlane.f32.xlu0 %v422
    %v424 = vpop.xlane.xlu0 %423
    %v425 = vadd.f32 %v347, %v348
    %v426 = vadd.f32 %v425, %v349
    %v427 = vadd.f32 %v426, %v350
    %428 = vadd.xlane.f32.xlu0 %v427
    %v429 = vpop.xlane.xlu0 %428
    %v430 = vadd.f32 %v351, %v352
    %v431 = vadd.f32 %v430, %v353
    %v432 = vadd.f32 %v431, %v354
    %433 = vadd.xlane.f32.xlu0 %v432
    %v434 = vpop.xlane.xlu0 %433
    %v435 = vsub.f32 0.0, %v359
    %v436 = vsub.f32 0.0, %v364
    %v437 = vsub.f32 0.0, %v369
    %v438 = vsub.f32 0.0, %v374
    %v439 = vsub.f32 0.0, %v379
    %v440 = vsub.f32 0.0, %v384
    %v441 = vsub.f32 0.0, %v389
    %v442 = vsub.f32 0.0, %v394
    %v443 = vsub.f32 0.0, %v399
    %v444 = vsub.f32 0.0, %v404
    %v445 = vsub.f32 0.0, %v409
    %v446 = vsub.f32 0.0, %v414
    %v447 = vsub.f32 0.0, %v419
    %v448 = vsub.f32 0.0, %v424
    %v449 = vsub.f32 0.0, %v429
    %v450 = vsub.f32 0.0, %v434
    %v452 = vlaneseq
    %v453 = vshrl.u32 %v452, 7
    %v454 = vsub.s32 0, %v453
    %v455 = vrot.slane %v215, %v454
    %457 = vbcast.lane.b32.xlu0 %v455, 256
    %v458 = vpop.permute.xlu0 %457
    %s460 = sor.u32 256, 8
    %461 = vbcast.lane.b32.xlu0 %v455, %s460
    %v462 = vpop.permute.xlu0 %461
    %v463 = vlaneseq
    %v464 = vshrl.u32 %v463, 7
    %v465 = vsub.s32 1, %v464
    %v466 = vrot.slane %v215, %v465
    %468 = vbcast.lane.b32.xlu0 %v466, 256
    %v469 = vpop.permute.xlu0 %468
    %s471 = sor.u32 256, 8
    %472 = vbcast.lane.b32.xlu0 %v466, %s471
    %v473 = vpop.permute.xlu0 %472
    %v474 = vlaneseq
    %v475 = vshrl.u32 %v474, 7
    %v476 = vsub.s32 2, %v475
    %v477 = vrot.slane %v215, %v476
    %479 = vbcast.lane.b32.xlu0 %v477, 256
    %v480 = vpop.permute.xlu0 %479
    %s482 = sor.u32 256, 8
    %483 = vbcast.lane.b32.xlu0 %v477, %s482
    %v484 = vpop.permute.xlu0 %483
    %v485 = vlaneseq
    %v486 = vshrl.u32 %v485, 7
    %v487 = vsub.s32 3, %v486
    %v488 = vrot.slane %v215, %v487
    %490 = vbcast.lane.b32.xlu0 %v488, 256
    %v491 = vpop.permute.xlu0 %490
    %s493 = sor.u32 256, 8
    %494 = vbcast.lane.b32.xlu0 %v488, %s493
    %v495 = vpop.permute.xlu0 %494
    %v496 = vlaneseq
    %v497 = vshrl.u32 %v496, 7
    %v498 = vsub.s32 4, %v497
    %v499 = vrot.slane %v215, %v498
    %501 = vbcast.lane.b32.xlu0 %v499, 256
    %v502 = vpop.permute.xlu0 %501
    %s504 = sor.u32 256, 8
    %505 = vbcast.lane.b32.xlu0 %v499, %s504
    %v506 = vpop.permute.xlu0 %505
    %v507 = vlaneseq
    %v508 = vshrl.u32 %v507, 7
    %v509 = vsub.s32 5, %v508
    %v510 = vrot.slane %v215, %v509
    %512 = vbcast.lane.b32.xlu0 %v510, 256
    %v513 = vpop.permute.xlu0 %512
    %s515 = sor.u32 256, 8
    %516 = vbcast.lane.b32.xlu0 %v510, %s515
    %v517 = vpop.permute.xlu0 %516
    %v518 = vlaneseq
    %v519 = vshrl.u32 %v518, 7
    %v520 = vsub.s32 6, %v519
    %v521 = vrot.slane %v215, %v520
    %523 = vbcast.lane.b32.xlu0 %v521, 256
    %v524 = vpop.permute.xlu0 %523
    %s526 = sor.u32 256, 8
    %527 = vbcast.lane.b32.xlu0 %v521, %s526
    %v528 = vpop.permute.xlu0 %527
    %v529 = vlaneseq
    %v530 = vshrl.u32 %v529, 7
    %v531 = vsub.s32 7, %v530
    %v532 = vrot.slane %v215, %v531
    %534 = vbcast.lane.b32.xlu0 %v532, 256
    %v535 = vpop.permute.xlu0 %534
    %s537 = sor.u32 256, 8
    %538 = vbcast.lane.b32.xlu0 %v532, %s537
    %v539 = vpop.permute.xlu0 %538
    %v556 = vmul.f32 %v435, %v458
    %v557 = vmul.f32 %v436, %v462
    %v558 = vmul.f32 %v437, %v469
    %v559 = vmul.f32 %v438, %v473
    %v560 = vmul.f32 %v439, %v480
    %v561 = vmul.f32 %v440, %v484
    %v562 = vmul.f32 %v441, %v491
    %v563 = vmul.f32 %v442, %v495
    %v564 = vmul.f32 %v443, %v502
    %v565 = vmul.f32 %v444, %v506
    %v566 = vmul.f32 %v445, %v513
    %v567 = vmul.f32 %v446, %v517
    %v568 = vmul.f32 %v447, %v524
    %v569 = vmul.f32 %v448, %v528
    %v570 = vmul.f32 %v449, %v535
    %v571 = vmul.f32 %v450, %v539
    %v572 = vld [vmem:[%s3] sm:$0xff]
    %589 = vset.pattern.permute.xlu0 0
    %590 = vperm.xlu0 %589, %v556
    %v591 = vpop.permute.xlu0 %590
    %592 = vset.pattern.permute.xlu0 0
    %593 = vperm.xlu0 %592, %v557
    %v594 = vpop.permute.xlu0 %593
    %595 = vset.pattern.permute.xlu0 0
    %596 = vperm.xlu0 %595, %v558
    %v597 = vpop.permute.xlu0 %596
    %598 = vset.pattern.permute.xlu0 0
    %599 = vperm.xlu0 %598, %v559
    %v600 = vpop.permute.xlu0 %599
    %601 = vset.pattern.permute.xlu0 0
    %602 = vperm.xlu0 %601, %v560
    %v603 = vpop.permute.xlu0 %602
    %604 = vset.pattern.permute.xlu0 0
    %605 = vperm.xlu0 %604, %v561
    %v606 = vpop.permute.xlu0 %605
    %607 = vset.pattern.permute.xlu0 0
    %608 = vperm.xlu0 %607, %v562
    %v609 = vpop.permute.xlu0 %608
    %610 = vset.pattern.permute.xlu0 0
    %611 = vperm.xlu0 %610, %v563
    %v612 = vpop.permute.xlu0 %611
    %613 = vset.pattern.permute.xlu0 0
    %614 = vperm.xlu0 %613, %v564
    %v615 = vpop.permute.xlu0 %614
    %616 = vset.pattern.permute.xlu0 0
    %617 = vperm.xlu0 %616, %v565
    %v618 = vpop.permute.xlu0 %617
    %619 = vset.pattern.permute.xlu0 0
    %620 = vperm.xlu0 %619, %v566
    %v621 = vpop.permute.xlu0 %620
    %622 = vset.pattern.permute.xlu0 0
    %623 = vperm.xlu0 %622, %v567
    %v624 = vpop.permute.xlu0 %623
    %625 = vset.pattern.permute.xlu0 0
    %626 = vperm.xlu0 %625, %v568
    %v627 = vpop.permute.xlu0 %626
    %628 = vset.pattern.permute.xlu0 0
    %629 = vperm.xlu0 %628, %v569
    %v630 = vpop.permute.xlu0 %629
    %631 = vset.pattern.permute.xlu0 0
    %632 = vperm.xlu0 %631, %v570
    %v633 = vpop.permute.xlu0 %632
    %634 = vset.pattern.permute.xlu0 0
    %635 = vperm.xlu0 %634, %v571
    %v636 = vpop.permute.xlu0 %635
    %v637 = vlaneseq
    %v638 = vshrl.u32 %v637, 7
    %v639 = vsub.s32 %v217, %v638
    %v640 = vrot.slane %v591, %v639
    %v641 = vadd.s32 %v217, 4294967288
    %v642 = vlaneseq
    %v643 = vshrl.u32 %v642, 7
    %v644 = vsub.s32 %v641, %v643
    %v645 = vrot.slane %v594, %v644
    %vm646 = vcmask 130112
    %v647 = vsel %vm646, %v645, %v640
    %v648 = vlaneseq
    %v649 = vshrl.u32 %v648, 7
    %v650 = vsub.s32 %v217, %v649
    %v651 = vrot.slane %v597, %v650
    %v652 = vlaneseq
    %v653 = vshrl.u32 %v652, 7
    %v654 = vsub.s32 %v641, %v653
    %v655 = vrot.slane %v600, %v654
    %v656 = vsel %vm646, %v655, %v651
    %v657 = vlaneseq
    %v658 = vshrl.u32 %v657, 7
    %v659 = vsub.s32 %v217, %v658
    %v660 = vrot.slane %v603, %v659
    %v661 = vlaneseq
    %v662 = vshrl.u32 %v661, 7
    %v663 = vsub.s32 %v641, %v662
    %v664 = vrot.slane %v606, %v663
    %v665 = vsel %vm646, %v664, %v660
    %v666 = vlaneseq
    %v667 = vshrl.u32 %v666, 7
    %v668 = vsub.s32 %v217, %v667
    %v669 = vrot.slane %v609, %v668
    %v670 = vlaneseq
    %v671 = vshrl.u32 %v670, 7
    %v672 = vsub.s32 %v641, %v671
    %v673 = vrot.slane %v612, %v672
    %v674 = vsel %vm646, %v673, %v669
    %v675 = vlaneseq
    %v676 = vshrl.u32 %v675, 7
    %v677 = vsub.s32 %v217, %v676
    %v678 = vrot.slane %v615, %v677
    %v679 = vlaneseq
    %v680 = vshrl.u32 %v679, 7
    %v681 = vsub.s32 %v641, %v680
    %v682 = vrot.slane %v618, %v681
    %v683 = vsel %vm646, %v682, %v678
    %v684 = vlaneseq
    %v685 = vshrl.u32 %v684, 7
    %v686 = vsub.s32 %v217, %v685
    %v687 = vrot.slane %v621, %v686
    %v688 = vlaneseq
    %v689 = vshrl.u32 %v688, 7
    %v690 = vsub.s32 %v641, %v689
    %v691 = vrot.slane %v624, %v690
    %v692 = vsel %vm646, %v691, %v687
    %v693 = vlaneseq
    %v694 = vshrl.u32 %v693, 7
    %v695 = vsub.s32 %v217, %v694
    %v696 = vrot.slane %v627, %v695
    %v697 = vlaneseq
    %v698 = vshrl.u32 %v697, 7
    %v699 = vsub.s32 %v641, %v698
    %v700 = vrot.slane %v630, %v699
    %v701 = vsel %vm646, %v700, %v696
    %v702 = vlaneseq
    %v703 = vshrl.u32 %v702, 7
    %v704 = vsub.s32 %v217, %v703
    %v705 = vrot.slane %v633, %v704
    %v706 = vlaneseq
    %v707 = vshrl.u32 %v706, 7
    %v708 = vsub.s32 %v641, %v707
    %v709 = vrot.slane %v636, %v708
    %v710 = vsel %vm646, %v709, %v705
    %vm711 = vcmask 1041409
    %v712 = vsel %vm711, %v656, %v647
    %vm713 = vcmask 1042434
    %v714 = vsel %vm713, %v665, %v712
    %vm715 = vcmask 1043459
    %v716 = vsel %vm715, %v674, %v714
    %vm717 = vcmask 1044484
    %v718 = vsel %vm717, %v683, %v716
    %vm719 = vcmask 1045509
    %v720 = vsel %vm719, %v692, %v718
    %vm721 = vcmask 1046534
    %v722 = vsel %vm721, %v701, %v720
    %vm723 = vcmask 1047559
    %v724 = vsel %vm723, %v710, %v722
    %vm726 = vcmask 130048
    %v727 = vsel %vm726, %v724, 0.0
    %728 = vadd.xlane.f32.xlu0 %v727
    %v729 = vpop.xlane.xlu0 %728
    %v730 = vadd.f32 %v572, %v729
    %vm731 = vcmask 7168
    %732 = vst.msk [vmem:[%s3] sm:$0xff] %vm731, %v730
    // Predicated region
    $region30: #{tpu_custom_call.1} parent=1 // pred_check
      %p733 = pneg %p54
    $region31: #{tpu_custom_call.1} parent=1 // pred_check_branch
      %735 = sbr.rel (%p733) target = $region33
    $region32: #{tpu_custom_call.1} parent=1 // pred_region
      %v736 = vld [vmem:[%s4] sm:$0xff]
      %v737 = vsel %vm726, %v215, 0.0
      %738 = vadd.xlane.f32.xlu0 %v737
      %v739 = vpop.xlane.xlu0 %738
      %v740 = vadd.f32 %v736, %v739
      %741 = vst.msk [vmem:[%s4] sm:$0xff] %vm731, %v740
    $region33: #{tpu_custom_call.1} parent=1 // pred_fallthru
      _
    // Predicated region
    $region34: #{tpu_custom_call.1} parent=1 // pred_check
      _
    $region35: #{tpu_custom_call.1} parent=1 // pred_check_branch
      %743 = sbr.rel (0) target = $region37
    $region36: #{tpu_custom_call.1} parent=1 // pred_region
      _
    $region37: #{tpu_custom_call.1} parent=1 // pred_fallthru
      _
    // Predicated region
    $region38: #{tpu_custom_call.1} parent=1 // pred_check
      _
    $region39: #{tpu_custom_call.1} parent=1 // pred_check_branch
      %745 = sbr.rel (0) target = $region41
    $region40: #{tpu_custom_call.1} parent=1 // pred_region
      _
    $region41: #{tpu_custom_call.1} parent=1 // pred_fallthru
      _
    // Predicated region
    $region42: #{tpu_custom_call.1} parent=1 // pred_check
      _
    $region43: #{tpu_custom_call.1} parent=1 // pred_check_branch
      %747 = sbr.rel (0) target = $region45
    $region44: #{tpu_custom_call.1} parent=1 // pred_region
      _
    $region45: #{tpu_custom_call.1} parent=1 // pred_fallthru
      _
    // Predicated region
    $region46: #{tpu_custom_call.1} parent=1 // pred_check
      _
    $region47: #{tpu_custom_call.1} parent=1 // pred_check_branch
      %749 = sbr.rel (0) target = $region49
    $region48: #{tpu_custom_call.1} parent=1 // pred_region
      _
    $region49: #{tpu_custom_call.1} parent=1 // pred_fallthru
      _
    %750 = vsyncpa [#allocation3], 1
    %751 = vsyncpa [#allocation5], 1

</llo_original>
